<compile_context>
chip_gen: v7x
topology: tpu7x:2x2x1
jax: 0.10.0
libtpu: 0.0.40
codegen_flags: <defaults>
</compile_context>

<pallas_src>
import jax
import jax.numpy as jnp
from jax.experimental import pallas as pl
from jax.experimental.pallas import tpu as pltpu


def _attn_pool_kernel(w_ref, x_ref, o_ref, acc_ref):
    # w_ref:   (1, Cp)        -- 1x1 conv weight (f32, zero-padded channels)
    # x_ref:   (BN, Cp, THW)  -- batch-block x HW-tile of the input
    # o_ref:   (BN, 1, Cp)    -- pooled output for this batch block
    # acc_ref: (BN, 1, Cp)    -- f32 running sum across HW tiles
    t = pl.program_id(1)

    @pl.when(t == 0)
    def _init():
        acc_ref[...] = jnp.zeros_like(acc_ref)

    x = x_ref[...].astype(jnp.float32)                         # (BN, Cp, THW)
    w = jnp.broadcast_to(w_ref[...][None], (x.shape[0], 1, x.shape[1]))
    # Per-pixel attention logits: (BN, 1, Cp) @ (BN, Cp, THW) -> (BN, 1, THW)
    logits = jnp.einsum("boc,bcl->bol", w, x,
                        preferred_element_type=jnp.float32)
    attn = jax.nn.sigmoid(logits)                              # (BN, 1, THW)
    # Attention-weighted spatial sum: (BN,1,THW) x (BN,Cp,THW) -> (BN,1,Cp)
    pooled = jnp.einsum("bol,bcl->boc", attn, x,
                        preferred_element_type=jnp.float32)
    acc_ref[...] += pooled

    @pl.when(t == pl.num_programs(1) - 1)
    def _finalize():
        o_ref[...] = acc_ref[...].astype(o_ref.dtype)


def _round_up(x, m):
    return ((x + m - 1) // m) * m


def _choose_tiling(n, c_pad, hw, itemsize):
    """Pick (batch_block, hw_tile, hw_padded)."""
    # Keep the double-buffered x tile <= ~16 MiB (8 MiB per buffer) so the
    # kernel fits comfortably in v7x VMEM without raising vmem limits.
    per_buffer_budget = 8 * 1024 * 1024
    hw128 = _round_up(hw, 128)
    max_t = max(128, (per_buffer_budget // (c_pad * itemsize)) // 128 * 128)
    t_hw = min(hw128, max_t)
    hw_pad = _round_up(hw, t_hw)

    bn = 1
    if hw_pad == t_hw:
        # One HW tile covers the whole map: grow the per-step DMA by blocking
        # batch elements (target ~1 MiB per step, capped for codegen size).
        tile_bytes = c_pad * t_hw * itemsize
        bn = max(1, min(n, 16, (1 * 1024 * 1024) // max(tile_bytes, 1)))
    return bn, t_hw, hw_pad


def global_attn_pool2d(x_nchw: jax.Array, weight: jax.Array) -> jax.Array:
    """x_nchw: (N, C, H, W); weight: (1, C, 1, 1) conv weight. Returns (N, C, 1, 1)."""
    N, C, H, W = x_nchw.shape
    HW = H * W
    itemsize = jnp.dtype(x_nchw.dtype).itemsize

    # Sublane-align C (8 for f32, 16 for bf16, ...).
    c_pad = _round_up(C, max(8, 32 // itemsize))
    bn, t_hw, hw_pad = _choose_tiling(N, c_pad, HW, itemsize)
    n_pad = _round_up(N, bn)

    x_flat = x_nchw.reshape(N, C, HW)
    x_p = jnp.pad(x_flat, ((0, n_pad - N), (0, c_pad - C), (0, hw_pad - HW)))
    w_p = jnp.pad(weight.reshape(1, C).astype(jnp.float32),
                  ((0, 0), (0, c_pad - C)))

    grid = (n_pad // bn, hw_pad // t_hw)

    out = pl.pallas_call(
        _attn_pool_kernel,
        out_shape=jax.ShapeDtypeStruct((n_pad, 1, c_pad), x_nchw.dtype),
        grid_spec=pltpu.PrefetchScalarGridSpec(
            num_scalar_prefetch=0,
            grid=grid,
            in_specs=[
                pl.BlockSpec((1, c_pad), lambda b, t: (0, 0)),            # weight
                pl.BlockSpec((bn, c_pad, t_hw), lambda b, t: (b, 0, t)),  # x tile
            ],
            out_specs=pl.BlockSpec((bn, 1, c_pad), lambda b, t: (b, 0, 0)),
            scratch_shapes=[pltpu.VMEM((bn, 1, c_pad), jnp.float32)],
        ),
        compiler_params=pltpu.CompilerParams(
            dimension_semantics=("parallel", "arbitrary"),
        ),
        cost_estimate=pl.CostEstimate(
            flops=4 * N * C * HW,
            transcendentals=N * HW,
            bytes_accessed=(N * C * HW + N * C) * itemsize + C * 4,
        ),
    )(w_p, x_p)

    return out[:N, 0, :C].reshape(N, C, 1, 1)


def _reference(x_nchw, weight):
    # Pure-JAX reference mirroring the PyTorch forward.
    w = weight.reshape(-1)                                  # (C,)
    logits = jnp.einsum("nchw,c->nhw", x_nchw, w)[:, None]  # (N, 1, H, W)
    attn = jax.nn.sigmoid(logits)
    return jnp.sum(x_nchw * attn, axis=(-2, -1), keepdims=True)


if __name__ == "__main__":
    key = jax.random.PRNGKey(0)
    kx, kw = jax.random.split(key)

    N, C, H, W = 2, 4, 16, 16
    x = jax.random.normal(kx, (N, C, H, W), dtype=jnp.float32)
    # Conv2d(C, 1, kernel_size=1, bias=False) weight shape: (1, C, 1, 1)
    bound = 1.0 / jnp.sqrt(jnp.float32(C))
    weight = jax.random.uniform(
        kw, (1, C, 1, 1), minval=-bound, maxval=bound, dtype=jnp.float32
    )

    out = jax.block_until_ready(global_attn_pool2d(x, weight))
    ref = _reference(x, weight)

    assert out.shape == (N, C, 1, 1), out.shape
    max_err = float(jnp.max(jnp.abs(out - ref)))
    assert jnp.allclose(out, ref, atol=1e-4, rtol=1e-4), max_err
    print("KERNEL_OK")
</pallas_src>

<mosaic_0001>
module attributes {stable_mosaic.version = 11 : i64} {
  func.func @_attn_pool_kernel(%arg0: i32, %arg1: i32, %arg2: memref<1x8xf32, #tpu.memory_space<vmem>>, %arg3: memref<2x8x256xf32, #tpu.memory_space<vmem>>, %arg4: memref<2x1x8xf32, #tpu.memory_space<vmem>>, %arg5: memref<2x1x8xf32, #tpu.memory_space<vmem>>) attributes {dimension_semantics = [#tpu.dimension_semantics<parallel>, #tpu.dimension_semantics<arbitrary>], iteration_bounds = array<i64: 1, 1>, scalar_prefetch = 0 : i64, scratch_operands = 1 : i64, tpu.core_type = #tpu.core_type<tc>, window_params = [{pipeline_mode = #tpu.pipeline_mode<synchronous>, transform_indices = @transform_0, window_bounds = array<i64: 1, 8>}, {transform_indices = @transform_1, window_bounds = array<i64: 2, 8, 256>}, {transform_indices = @transform_2, window_bounds = array<i64: 2, 1, 8>}]} {
    %c0_i32 = arith.constant 0 : i32
    %0 = arith.cmpi eq, %arg1, %c0_i32 : i32
    %1 = arith.extui %0 : i1 to i32
    %c0_i32_0 = arith.constant 0 : i32
    %2 = arith.cmpi ne, %1, %c0_i32_0 : i32
    scf.if %2 {
      %cst_15 = arith.constant 0.000000e+00 : f32
      %21 = vector.broadcast %cst_15 : f32 to vector<2x1x8xf32>
      %c0_16 = arith.constant 0 : index
      %c0_17 = arith.constant 0 : index
      %c0_18 = arith.constant 0 : index
      %22 = vector.load %arg5[%c0_16, %c0_17, %c0_18] : memref<2x1x8xf32, #tpu.memory_space<vmem>>, vector<2x1x8xf32>
      tpu.vector_store %arg5[%c0_16, %c0_17, %c0_18], %21 {strides = array<i32>} : memref<2x1x8xf32, #tpu.memory_space<vmem>>, vector<2x1x8xf32>,
    } else {
    }
    %c0 = arith.constant 0 : index
    %c0_1 = arith.constant 0 : index
    %c0_2 = arith.constant 0 : index
    %3 = vector.load %arg3[%c0, %c0_1, %c0_2] : memref<2x8x256xf32, #tpu.memory_space<vmem>>, vector<2x8x256xf32>
    %c0_3 = arith.constant 0 : index
    %c0_4 = arith.constant 0 : index
    %4 = vector.load %arg2[%c0_3, %c0_4] : memref<1x8xf32, #tpu.memory_space<vmem>>, vector<1x8xf32>
    %5 = vector.shape_cast %4 : vector<1x8xf32> to vector<1x1x8xf32>
    %6 = vector.shape_cast %5 : vector<1x1x8xf32> to vector<1x1x8xf32>
    %7 = vector.broadcast %6 : vector<1x1x8xf32> to vector<2x1x8xf32>
    "tpu.trace_start"() <{level = 10 : i32, message = "boc,bcl->bol"}> : () -> ()
    %cst = arith.constant dense<0.000000e+00> : vector<2x1x256xf32>
    %8 = tpu.matmul %7, %3, %cst {dimension_numbers = #tpu.dot_dimension_numbers<[2], [1], [1], [2], [0, 0, 0, 1, 1, 2], [0], [0]>} : vector<2x1x8xf32>, vector<2x8x256xf32>, vector<2x1x256xf32> -> vector<2x1x256xf32>
    "tpu.trace_stop"() : () -> ()
    %9 = arith.negf %8 : vector<2x1x256xf32>
    %10 = math.exp %9 : vector<2x1x256xf32>
    %cst_5 = arith.constant 1.000000e+00 : f32
    %11 = vector.broadcast %cst_5 : f32 to vector<2x1x256xf32>
    %12 = arith.addf %11, %10 : vector<2x1x256xf32>
    %13 = arith.divf %11, %12 : vector<2x1x256xf32>
    "tpu.trace_start"() <{level = 10 : i32, message = "bol,bcl->boc"}> : () -> ()
    %cst_6 = arith.constant dense<0.000000e+00> : vector<2x1x8xf32>
    %14 = tpu.matmul %13, %3, %cst_6 {dimension_numbers = #tpu.dot_dimension_numbers<[2], [2], [1], [1], [0, 0, 0, 1, 1, 1], [0], [0]>} : vector<2x1x256xf32>, vector<2x8x256xf32>, vector<2x1x8xf32> -> vector<2x1x8xf32>
    "tpu.trace_stop"() : () -> ()
    %c0_7 = arith.constant 0 : index
    %c0_8 = arith.constant 0 : index
    %c0_9 = arith.constant 0 : index
    %15 = vector.load %arg5[%c0_7, %c0_8, %c0_9] : memref<2x1x8xf32, #tpu.memory_space<vmem>>, vector<2x1x8xf32>
    %16 = arith.addf %15, %14 : vector<2x1x8xf32>
    %c0_10 = arith.constant 0 : index
    %c0_11 = arith.constant 0 : index
    %c0_12 = arith.constant 0 : index
    %17 = vector.load %arg5[%c0_10, %c0_11, %c0_12] : memref<2x1x8xf32, #tpu.memory_space<vmem>>, vector<2x1x8xf32>
    tpu.vector_store %arg5[%c0_10, %c0_11, %c0_12], %16 {strides = array<i32>} : memref<2x1x8xf32, #tpu.memory_space<vmem>>, vector<2x1x8xf32>,
    %c0_i32_13 = arith.constant 0 : i32
    %18 = arith.cmpi eq, %arg1, %c0_i32_13 : i32
    %19 = arith.extui %18 : i1 to i32
    %c0_i32_14 = arith.constant 0 : i32
    %20 = arith.cmpi ne, %19, %c0_i32_14 : i32
    scf.if %20 {
      %c0_15 = arith.constant 0 : index
      %c0_16 = arith.constant 0 : index
      %c0_17 = arith.constant 0 : index
      %21 = vector.load %arg5[%c0_15, %c0_16, %c0_17] : memref<2x1x8xf32, #tpu.memory_space<vmem>>, vector<2x1x8xf32>
      %c0_18 = arith.constant 0 : index
      %c0_19 = arith.constant 0 : index
      %c0_20 = arith.constant 0 : index
      %22 = vector.load %arg4[%c0_18, %c0_19, %c0_20] : memref<2x1x8xf32, #tpu.memory_space<vmem>>, vector<2x1x8xf32>
      tpu.vector_store %arg4[%c0_18, %c0_19, %c0_20], %21 {strides = array<i32>} : memref<2x1x8xf32, #tpu.memory_space<vmem>>, vector<2x1x8xf32>,
    } else {
    }
    return
  }
  func.func @transform_0(%arg0: i32, %arg1: i32) -> (i32, i32) {
    %c0_i32 = arith.constant 0 : i32
    %c0_i32_0 = arith.constant 0 : i32
    %c0_i32_1 = arith.constant 0 : i32
    return %c0_i32, %c0_i32_0 : i32, i32
  }
  func.func @transform_1(%arg0: i32, %arg1: i32) -> (i32, i32, i32) {
    %c0_i32 = arith.constant 0 : i32
    %c0_i32_0 = arith.constant 0 : i32
    return %arg0, %c0_i32, %arg1 : i32, i32, i32
  }
  func.func @transform_2(%arg0: i32, %arg1: i32) -> (i32, i32, i32) {
    %c0_i32 = arith.constant 0 : i32
    %c0_i32_0 = arith.constant 0 : i32
    %c0_i32_1 = arith.constant 0 : i32
    return %arg0, %c0_i32, %c0_i32_0 : i32, i32, i32
  }
}

</mosaic_0001>

<llo_original>
// kernel: tpu_custom_call.1
$region0: #{tpu_custom_call.1}
  #allocation0 [shape = 'u32[]', space=smem, size = 0x4, offset = 0x4, fixed_abs, tag = 'smem constant byte address 0x4 - core index']
  #allocation1 [shape = 'u32[144,128]{1,0:T(1,128)}', space=vmem, size = 0x12000, scoped, tag = 'internal scratch']
  #allocation2 [shape = 'f32[2,1,8]{2,1,0:T(1,128)}', space=vmem, size = 0x400, scoped, tag = 'scratch operand']
  %s0 = inlined_call_operand.hbm [shape: f32[1,8], index: 0, kind: input, shape index: {}]
  %s1 = inlined_call_operand.hbm [shape: f32[2,8,256], index: 1, kind: input, shape index: {}]
  %s2 = inlined_call_operand.hbm [shape: f32[2,1,8], index: 2, kind: output, shape index: {}]
  %s3 = sld [smem:[#allocation0]]
  $region34: #{tpu_custom_call.1} parent=0
    _
  %s5 = ssub.s32 1, %s3
  %s6 = scalar_select 0, %s5, %s3
  $region1: #{tpu_custom_call.1} parent=0
    #allocation3 [shape = 'u8[512]{0}', space=vmem, size = 0x400, scoped, tag = 'input window, operand 0, single buffered']
    #allocation4 [shape = 's32[1]{0}', space=sflag, size = 0x4, scoped, tag = 'scoped memory for tpu_custom_call.1']
    #allocation5 [shape = 's32[1]{0}', space=sflag, size = 0x4, scoped, tag = 'scoped memory for tpu_custom_call.1']
    #allocation6 [shape = 'u8[16384]{0}', space=vmem, size = 0x4000, scoped, tag = 'input window, operand 1, single buffered']
    #allocation7 [shape = 's32[1]{0}', space=sflag, size = 0x4, scoped, tag = 'scoped memory for tpu_custom_call.1']
    #allocation8 [shape = 'u8[1024]{0}', space=vmem, size = 0x400, scoped, tag = 'output window, operand 0, single buffered']
    %7 = vsyncpa [#allocation4], 0
    %8 = vsyncpa [#allocation7], 0
    %9 = vsyncpa [#allocation5], 0
    // Predicated region
    $region2: #{tpu_custom_call.1} parent=1 // pred_check
      _
    $region3: #{tpu_custom_call.1} parent=1 // pred_check_branch
      %11 = sbr.rel (0) target = $region5
    $region4: #{tpu_custom_call.1} parent=1 // pred_region
      %s13 = ssub.s32 16, 16
      %14 = vsyncadd [#allocation4], %s13
      %s16 = sshll.u32 [#allocation3], 4
      %s17 = int_to_ptr.vmem [resolvable:$true] %s16
      %19 = dma.hbm_to_vmem [thread:$0]  %s0, 16, %s17, [#allocation4]
    $region5: #{tpu_custom_call.1} parent=1 // pred_fallthru
      _
    // Predicated region
    $region6: #{tpu_custom_call.1} parent=1 // pred_check
      _
    $region7: #{tpu_custom_call.1} parent=1 // pred_check_branch
      %21 = sbr.rel (0) target = $region9
    $region8: #{tpu_custom_call.1} parent=1 // pred_region
      %s23 = ssub.s32 512, 512
      %24 = vsyncadd [#allocation7], %s23
      %s25 = sshll.u32 [#allocation6], 4
      %s26 = int_to_ptr.vmem [resolvable:$true] %s25
      %31 = dma.hbm_to_vmem [thread:$0]  %s1, 512, %s26, [#allocation7], 256, 256, 16
    $region9: #{tpu_custom_call.1} parent=1 // pred_fallthru
      _
    // Predicated region
    $region10: #{tpu_custom_call.1} parent=1 // pred_check
      _
    $region11: #{tpu_custom_call.1} parent=1 // pred_check_branch
      %33 = sbr.rel (0) target = $region13
    $region12: #{tpu_custom_call.1} parent=1 // pred_region
      %34 = dma.done [#allocation4], 16
    $region13: #{tpu_custom_call.1} parent=1 // pred_fallthru
      _
    // Predicated region
    $region14: #{tpu_custom_call.1} parent=1 // pred_check
      _
    $region15: #{tpu_custom_call.1} parent=1 // pred_check_branch
      %36 = sbr.rel (0) target = $region17
    $region16: #{tpu_custom_call.1} parent=1 // pred_region
      %37 = dma.done [#allocation7], 512
    $region17: #{tpu_custom_call.1} parent=1 // pred_fallthru
      _
    %p38 = scmp.eq.s32.totalorder 0, 0
    // Predicated region
    $region18: #{tpu_custom_call.1} parent=1 // pred_check
      %p39 = pneg %p38
    $region19: #{tpu_custom_call.1} parent=1 // pred_check_branch
      %41 = sbr.rel (%p39) target = $region21
    $region20: #{tpu_custom_call.1} parent=1 // pred_region
      %vm42 = vcmask 57344
      %43 = vst.msk [vmem:[#allocation2] sm:$0x1] %vm42, 0.0
      %44 = vst.msk [vmem:[#allocation2 + $0x1] sm:$0x1] %vm42, 0.0
    $region21: #{tpu_custom_call.1} parent=1 // pred_fallthru
      _
    %v45 = vld [vmem:[#allocation6] sm:$0xff]
    %v46 = vld [vmem:[#allocation6 + $0x8] sm:$0xff]
    %v47 = vld [vmem:[#allocation6 + $0x10] sm:$0xff]
    %v48 = vld [vmem:[#allocation6 + $0x18] sm:$0xff]
    %v49 = vld [vmem:[#allocation3] sm:$0x1]
    %vm50 = vcmask 64512
    %v52 = vsel %vm50, %v49, 0
    %54 = vmatprep.subr.mxu0 %v46
    %55 = vmatpush1.msra.mxu0 %v45
    %56 = vmatprep.subr.mxu0 0.0
    %57 = vmatpush1.msra.mxu0 0.0
    %58 = vmatprep.subr.mxu0 0.0
    %59 = vmatpush1.msra.mxu0 0.0
    %60 = vmatprep.subr.mxu0 0.0
    %61 = vmatpush1.msra.mxu0 0.0
    %62 = vmatprep.subr.mxu0 0.0
    %63 = vmatpush1.msra.mxu0 0.0
    %64 = vmatprep.subr.mxu0 0.0
    %65 = vmatpush1.msra.mxu0 0.0
    %66 = vmatprep.subr.mxu0 0.0
    %67 = vmatpush1.msra.mxu0 0.0
    %68 = vmatprep.subr.mxu0 0.0
    %69 = vmatpush1.msra.mxu0 0.0
    %70 = vmatprep.subr.mxu0 0.0
    %71 = vmatpush1.msra.mxu0 0.0
    %72 = vmatprep.subr.mxu0 0.0
    %73 = vmatpush1.msra.mxu0 0.0
    %74 = vmatprep.subr.mxu0 0.0
    %75 = vmatpush1.msra.mxu0 0.0
    %76 = vmatprep.subr.mxu0 0.0
    %77 = vmatpush1.msra.mxu0 0.0
    %78 = vmatprep.subr.mxu0 0.0
    %79 = vmatpush1.msra.mxu0 0.0
    %80 = vmatprep.subr.mxu0 0.0
    %81 = vmatpush1.msra.mxu0 0.0
    %82 = vmatprep.subr.mxu0 0.0
    %83 = vmatpush1.msra.mxu0 0.0
    %84 = vmatprep.subr.mxu0 0.0
    %85 = vmatpush1.msra.mxu0 0.0
    %86 = vmatprep.subr.mxu0 0.0
    %87 = vmatpush1.msra.mxu0 0.0
    %88 = vmatprep.subr.mxu0 0.0
    %89 = vmatpush1.msra.mxu0 0.0
    %90 = vmatprep.subr.mxu0 0.0
    %91 = vmatpush1.msra.mxu0 0.0
    %92 = vmatprep.subr.mxu0 0.0
    %93 = vmatpush1.msra.mxu0 0.0
    %94 = vmatprep.subr.mxu0 0.0
    %95 = vmatpush1.msra.mxu0 0.0
    %96 = vmatprep.subr.mxu0 0.0
    %97 = vmatpush1.msra.mxu0 0.0
    %98 = vmatprep.subr.mxu0 0.0
    %99 = vmatpush1.msra.mxu0 0.0
    %100 = vmatprep.subr.mxu0 0.0
    %101 = vmatpush1.msra.mxu0 0.0
    %102 = vmatprep.subr.mxu0 0.0
    %103 = vmatpush1.msra.mxu0 0.0
    %104 = vmatprep.subr.mxu0 0.0
    %105 = vmatpush1.msra.mxu0 0.0
    %106 = vmatprep.subr.mxu0 0.0
    %107 = vmatpush1.msra.mxu0 0.0
    %108 = vmatprep.subr.mxu0 0.0
    %109 = vmatpush1.msra.mxu0 0.0
    %110 = vmatprep.subr.mxu0 0.0
    %111 = vmatpush1.msra.mxu0 0.0
    %112 = vmatprep.subr.mxu0 0.0
    %113 = vmatpush1.msra.mxu0 0.0
    %114 = vmatprep.subr.mxu0 0.0
    %115 = vmatpush1.msra.mxu0 0.0
    %116 = vmatprep.subr.mxu0 0.0
    %117 = vmatpush1.msra.mxu0 0.0
    %118 = vmatprep.mubr.f32.mxu0 0.0
    %119 = vmatmul.mubr.f32.gmra.mrb[0].mxu0 %v52
    %v120 = vpop.f32.mrb[0].mxu0
    %v121 = vadd.f32 0.0, %v120
    %v122 = vpop.f32.mrb[0].mxu0
    %v123 = vadd.f32 0.0, %v122
    %124 = vdwg.mxu0
    %125 = vmatprep.subr.mxu0 %v48
    %126 = vmatpush1.msra.mxu0 %v47
    %127 = vmatprep.subr.mxu0 0.0
    %128 = vmatpush1.msra.mxu0 0.0
    %129 = vmatprep.subr.mxu0 0.0
    %130 = vmatpush1.msra.mxu0 0.0
    %131 = vmatprep.subr.mxu0 0.0
    %132 = vmatpush1.msra.mxu0 0.0
    %133 = vmatprep.subr.mxu0 0.0
    %134 = vmatpush1.msra.mxu0 0.0
    %135 = vmatprep.subr.mxu0 0.0
    %136 = vmatpush1.msra.mxu0 0.0
    %137 = vmatprep.subr.mxu0 0.0
    %138 = vmatpush1.msra.mxu0 0.0
    %139 = vmatprep.subr.mxu0 0.0
    %140 = vmatpush1.msra.mxu0 0.0
    %141 = vmatprep.subr.mxu0 0.0
    %142 = vmatpush1.msra.mxu0 0.0
    %143 = vmatprep.subr.mxu0 0.0
    %144 = vmatpush1.msra.mxu0 0.0
    %145 = vmatprep.subr.mxu0 0.0
    %146 = vmatpush1.msra.mxu0 0.0
    %147 = vmatprep.subr.mxu0 0.0
    %148 = vmatpush1.msra.mxu0 0.0
    %149 = vmatprep.subr.mxu0 0.0
    %150 = vmatpush1.msra.mxu0 0.0
    %151 = vmatprep.subr.mxu0 0.0
    %152 = vmatpush1.msra.mxu0 0.0
    %153 = vmatprep.subr.mxu0 0.0
    %154 = vmatpush1.msra.mxu0 0.0
    %155 = vmatprep.subr.mxu0 0.0
    %156 = vmatpush1.msra.mxu0 0.0
    %157 = vmatprep.subr.mxu0 0.0
    %158 = vmatpush1.msra.mxu0 0.0
    %159 = vmatprep.subr.mxu0 0.0
    %160 = vmatpush1.msra.mxu0 0.0
    %161 = vmatprep.subr.mxu0 0.0
    %162 = vmatpush1.msra.mxu0 0.0
    %163 = vmatprep.subr.mxu0 0.0
    %164 = vmatpush1.msra.mxu0 0.0
    %165 = vmatprep.subr.mxu0 0.0
    %166 = vmatpush1.msra.mxu0 0.0
    %167 = vmatprep.subr.mxu0 0.0
    %168 = vmatpush1.msra.mxu0 0.0
    %169 = vmatprep.subr.mxu0 0.0
    %170 = vmatpush1.msra.mxu0 0.0
    %171 = vmatprep.subr.mxu0 0.0
    %172 = vmatpush1.msra.mxu0 0.0
    %173 = vmatprep.subr.mxu0 0.0
    %174 = vmatpush1.msra.mxu0 0.0
    %175 = vmatprep.subr.mxu0 0.0
    %176 = vmatpush1.msra.mxu0 0.0
    %177 = vmatprep.subr.mxu0 0.0
    %178 = vmatpush1.msra.mxu0 0.0
    %179 = vmatprep.subr.mxu0 0.0
    %180 = vmatpush1.msra.mxu0 0.0
    %181 = vmatprep.subr.mxu0 0.0
    %182 = vmatpush1.msra.mxu0 0.0
    %183 = vmatprep.subr.mxu0 0.0
    %184 = vmatpush1.msra.mxu0 0.0
    %185 = vmatprep.subr.mxu0 0.0
    %186 = vmatpush1.msra.mxu0 0.0
    %187 = vmatprep.subr.mxu0 0.0
    %188 = vmatpush1.msra.mxu0 0.0
    %189 = vmatprep.mubr.f32.mxu0 0.0
    %190 = vmatmul.mubr.f32.gmra.mrb[0].mxu0 %v52
    %v191 = vpop.f32.mrb[0].mxu0
    %v192 = vadd.f32 0.0, %v191
    %v193 = vpop.f32.mrb[0].mxu0
    %v194 = vadd.f32 0.0, %v193
    %195 = vdwg.mxu0
    %v196 = vxor.u32 %v121, 2147483648
    %v197 = vxor.u32 %v123, 2147483648
    %v198 = vxor.u32 %v192, 2147483648
    %v199 = vxor.u32 %v194, 2147483648
    %v200 = vmul.f32 %v196, 1.442695
    %v201 = vpow.pop %v200
    %v202 = vmul.f32 %v197, 1.442695
    %v203 = vpow.pop %v202
    %v204 = vmul.f32 %v198, 1.442695
    %v205 = vpow.pop %v204
    %v206 = vmul.f32 %v199, 1.442695
    %v207 = vpow.pop %v206
    %v208 = vadd.f32 %v201, 1.0
    %v209 = vadd.f32 %v203, 1.0
    %v210 = vadd.f32 %v205, 1.0
    %v211 = vadd.f32 %v207, 1.0
    %v212 = vrcp.pop %v208
    %v213 = vmul.f32 1.0, %v212
    %v214 = vrcp.pop %v209
    %v215 = vmul.f32 1.0, %v214
    %v216 = vrcp.pop %v210
    %v217 = vmul.f32 1.0, %v216
    %v218 = vrcp.pop %v211
    %v219 = vmul.f32 1.0, %v218
    %220 = vmatprep.subr.mxu0 %v46
    %221 = vmatpush1.xpose.msra.mxu0 %v45
    %222 = vmatprep.subr.mxu0 0.0
    %223 = vmatpush1.xpose.msra.mxu0 0.0
    %224 = vmatprep.subr.mxu0 0.0
    %225 = vmatpush1.xpose.msra.mxu0 0.0
    %226 = vmatprep.subr.mxu0 0.0
    %227 = vmatpush1.xpose.msra.mxu0 0.0
    %228 = vmatprep.subr.mxu0 0.0
    %229 = vmatpush1.xpose.msra.mxu0 0.0
    %230 = vmatprep.subr.mxu0 0.0
    %231 = vmatpush1.xpose.msra.mxu0 0.0
    %232 = vmatprep.subr.mxu0 0.0
    %233 = vmatpush1.xpose.msra.mxu0 0.0
    %234 = vmatprep.subr.mxu0 0.0
    %235 = vmatpush1.xpose.msra.mxu0 0.0
    %236 = vmatprep.subr.mxu0 0.0
    %237 = vmatpush1.xpose.msra.mxu0 0.0
    %238 = vmatprep.subr.mxu0 0.0
    %239 = vmatpush1.xpose.msra.mxu0 0.0
    %240 = vmatprep.subr.mxu0 0.0
    %241 = vmatpush1.xpose.msra.mxu0 0.0
    %242 = vmatprep.subr.mxu0 0.0
    %243 = vmatpush1.xpose.msra.mxu0 0.0
    %244 = vmatprep.subr.mxu0 0.0
    %245 = vmatpush1.xpose.msra.mxu0 0.0
    %246 = vmatprep.subr.mxu0 0.0
    %247 = vmatpush1.xpose.msra.mxu0 0.0
    %248 = vmatprep.subr.mxu0 0.0
    %249 = vmatpush1.xpose.msra.mxu0 0.0
    %250 = vmatprep.subr.mxu0 0.0
    %251 = vmatpush1.xpose.msra.mxu0 0.0
    %252 = vmatprep.subr.mxu0 0.0
    %253 = vmatpush1.xpose.msra.mxu0 0.0
    %254 = vmatprep.subr.mxu0 0.0
    %255 = vmatpush1.xpose.msra.mxu0 0.0
    %256 = vmatprep.subr.mxu0 0.0
    %257 = vmatpush1.xpose.msra.mxu0 0.0
    %258 = vmatprep.subr.mxu0 0.0
    %259 = vmatpush1.xpose.msra.mxu0 0.0
    %260 = vmatprep.subr.mxu0 0.0
    %261 = vmatpush1.xpose.msra.mxu0 0.0
    %262 = vmatprep.subr.mxu0 0.0
    %263 = vmatpush1.xpose.msra.mxu0 0.0
    %264 = vmatprep.subr.mxu0 0.0
    %265 = vmatpush1.xpose.msra.mxu0 0.0
    %266 = vmatprep.subr.mxu0 0.0
    %267 = vmatpush1.xpose.msra.mxu0 0.0
    %268 = vmatprep.subr.mxu0 0.0
    %269 = vmatpush1.xpose.msra.mxu0 0.0
    %270 = vmatprep.subr.mxu0 0.0
    %271 = vmatpush1.xpose.msra.mxu0 0.0
    %272 = vmatprep.subr.mxu0 0.0
    %273 = vmatpush1.xpose.msra.mxu0 0.0
    %274 = vmatprep.subr.mxu0 0.0
    %275 = vmatpush1.xpose.msra.mxu0 0.0
    %276 = vmatprep.subr.mxu0 0.0
    %277 = vmatpush1.xpose.msra.mxu0 0.0
    %278 = vmatprep.subr.mxu0 0.0
    %279 = vmatpush1.xpose.msra.mxu0 0.0
    %280 = vmatprep.subr.mxu0 0.0
    %281 = vmatpush1.xpose.msra.mxu0 0.0
    %282 = vmatprep.subr.mxu0 0.0
    %283 = vmatpush1.xpose.msra.mxu0 0.0
    %284 = vmatprep.mubr.f32.mxu0 %v215
    %285 = vmatmul.mubr.f32.gmra.mrb[0].mxu0 %v213
    %v286 = vpop.f32.mrb[0].mxu0
    %v287 = vadd.f32 0.0, %v286
    %v288 = vpop.f32.mrb[0].mxu0
    %289 = vdwg.mxu0
    %290 = vmatprep.subr.mxu0 %v48
    %291 = vmatpush1.xpose.msra.mxu0 %v47
    %292 = vmatprep.subr.mxu0 0.0
    %293 = vmatpush1.xpose.msra.mxu0 0.0
    %294 = vmatprep.subr.mxu0 0.0
    %295 = vmatpush1.xpose.msra.mxu0 0.0
    %296 = vmatprep.subr.mxu0 0.0
    %297 = vmatpush1.xpose.msra.mxu0 0.0
    %298 = vmatprep.subr.mxu0 0.0
    %299 = vmatpush1.xpose.msra.mxu0 0.0
    %300 = vmatprep.subr.mxu0 0.0
    %301 = vmatpush1.xpose.msra.mxu0 0.0
    %302 = vmatprep.subr.mxu0 0.0
    %303 = vmatpush1.xpose.msra.mxu0 0.0
    %304 = vmatprep.subr.mxu0 0.0
    %305 = vmatpush1.xpose.msra.mxu0 0.0
    %306 = vmatprep.subr.mxu0 0.0
    %307 = vmatpush1.xpose.msra.mxu0 0.0
    %308 = vmatprep.subr.mxu0 0.0
    %309 = vmatpush1.xpose.msra.mxu0 0.0
    %310 = vmatprep.subr.mxu0 0.0
    %311 = vmatpush1.xpose.msra.mxu0 0.0
    %312 = vmatprep.subr.mxu0 0.0
    %313 = vmatpush1.xpose.msra.mxu0 0.0
    %314 = vmatprep.subr.mxu0 0.0
    %315 = vmatpush1.xpose.msra.mxu0 0.0
    %316 = vmatprep.subr.mxu0 0.0
    %317 = vmatpush1.xpose.msra.mxu0 0.0
    %318 = vmatprep.subr.mxu0 0.0
    %319 = vmatpush1.xpose.msra.mxu0 0.0
    %320 = vmatprep.subr.mxu0 0.0
    %321 = vmatpush1.xpose.msra.mxu0 0.0
    %322 = vmatprep.subr.mxu0 0.0
    %323 = vmatpush1.xpose.msra.mxu0 0.0
    %324 = vmatprep.subr.mxu0 0.0
    %325 = vmatpush1.xpose.msra.mxu0 0.0
    %326 = vmatprep.subr.mxu0 0.0
    %327 = vmatpush1.xpose.msra.mxu0 0.0
    %328 = vmatprep.subr.mxu0 0.0
    %329 = vmatpush1.xpose.msra.mxu0 0.0
    %330 = vmatprep.subr.mxu0 0.0
    %331 = vmatpush1.xpose.msra.mxu0 0.0
    %332 = vmatprep.subr.mxu0 0.0
    %333 = vmatpush1.xpose.msra.mxu0 0.0
    %334 = vmatprep.subr.mxu0 0.0
    %335 = vmatpush1.xpose.msra.mxu0 0.0
    %336 = vmatprep.subr.mxu0 0.0
    %337 = vmatpush1.xpose.msra.mxu0 0.0
    %338 = vmatprep.subr.mxu0 0.0
    %339 = vmatpush1.xpose.msra.mxu0 0.0
    %340 = vmatprep.subr.mxu0 0.0
    %341 = vmatpush1.xpose.msra.mxu0 0.0
    %342 = vmatprep.subr.mxu0 0.0
    %343 = vmatpush1.xpose.msra.mxu0 0.0
    %344 = vmatprep.subr.mxu0 0.0
    %345 = vmatpush1.xpose.msra.mxu0 0.0
    %346 = vmatprep.subr.mxu0 0.0
    %347 = vmatpush1.xpose.msra.mxu0 0.0
    %348 = vmatprep.subr.mxu0 0.0
    %349 = vmatpush1.xpose.msra.mxu0 0.0
    %350 = vmatprep.subr.mxu0 0.0
    %351 = vmatpush1.xpose.msra.mxu0 0.0
    %352 = vmatprep.subr.mxu0 0.0
    %353 = vmatpush1.xpose.msra.mxu0 0.0
    %354 = vmatprep.mubr.f32.mxu0 %v219
    %355 = vmatmul.mubr.f32.gmra.mrb[0].mxu0 %v217
    %v356 = vpop.f32.mrb[0].mxu0
    %v357 = vadd.f32 0.0, %v356
    %v358 = vpop.f32.mrb[0].mxu0
    %359 = vdwg.mxu0
    %v360 = vld [vmem:[#allocation2] sm:$0x1]
    %v361 = vld [vmem:[#allocation2 + $0x1] sm:$0x1]
    %v362 = vadd.f32 %v360, %v287
    %v363 = vadd.f32 %v361, %v357
    %vm364 = vcmask 57344
    %365 = vst.msk [vmem:[#allocation2] sm:$0x1] %vm364, %v362
    %366 = vst.msk [vmem:[#allocation2 + $0x1] sm:$0x1] %vm364, %v363
    // Predicated region
    $region22: #{tpu_custom_call.1} parent=1 // pred_check
      %p367 = pneg %p38
    $region23: #{tpu_custom_call.1} parent=1 // pred_check_branch
      %369 = sbr.rel (%p367) target = $region25
    $region24: #{tpu_custom_call.1} parent=1 // pred_region
      %v370 = vld [vmem:[#allocation2] sm:$0x1]
      %v371 = vld [vmem:[#allocation2 + $0x1] sm:$0x1]
      %372 = vst.msk [vmem:[#allocation8] sm:$0x1] %vm364, %v370
      %373 = vst.msk [vmem:[#allocation8 + $0x1] sm:$0x1] %vm364, %v371
    $region25: #{tpu_custom_call.1} parent=1 // pred_fallthru
      _
    // Predicated region
    $region26: #{tpu_custom_call.1} parent=1 // pred_check
      _
    $region27: #{tpu_custom_call.1} parent=1 // pred_check_branch
      %375 = sbr.rel (0) target = $region29
    $region28: #{tpu_custom_call.1} parent=1 // pred_region
      %s377 = ssub.s32 32, 32
      %378 = vsyncadd [#allocation5], %s377
      %s379 = sshll.u32 [#allocation8], 4
      %s380 = int_to_ptr.vmem [resolvable:$true] %s379
      %385 = dma.vmem_to_hbm [thread:$0]  %s380, 32, %s2, [#allocation5], 16, 16, 1
    $region29: #{tpu_custom_call.1} parent=1 // pred_fallthru
      _
    // Predicated region
    $region30: #{tpu_custom_call.1} parent=1 // pred_check
      _
    $region31: #{tpu_custom_call.1} parent=1 // pred_check_branch
      %387 = sbr.rel (0) target = $region33
    $region32: #{tpu_custom_call.1} parent=1 // pred_region
      %388 = dma.done [#allocation5], 32
    $region33: #{tpu_custom_call.1} parent=1 // pred_fallthru
      _
    %389 = vsyncpa [#allocation4], 1
    %390 = vsyncpa [#allocation7], 1
    %391 = vsyncpa [#allocation5], 1

</llo_original>
